<compile_context>
chip_gen: v7x
topology: tpu7x:2x2x1
jax: 0.10.0
libtpu: 0.0.40
codegen_flags: <defaults>
</compile_context>

<pallas_src>
import functools

import jax
import jax.numpy as jnp
from jax.experimental import pallas as pl
from jax.experimental.pallas import tpu as pltpu


def _layernorm_kernel(x_ref, g_ref, b_ref, o_ref, *, eps):
    x = x_ref[...].astype(jnp.float32)            # (tile_rows, F)
    n = x.shape[-1]

    mean = jnp.mean(x, axis=-1, keepdims=True)    # (tile_rows, 1) -- XLU reduce
    d = x - mean
    # torch.std() is unbiased (divide by N-1); the module adds eps to std, not var.
    var = jnp.sum(d * d, axis=-1, keepdims=True) * (1.0 / (n - 1))
    denom = jnp.sqrt(var) + eps                   # (tile_rows, 1)

    # EUP reciprocal instead of a VALU divide; two Newton-Raphson refinements on the
    # tiny per-row stats tensor restore ~f32 accuracy at negligible cost.
    inv = pl.reciprocal(denom, approx=True)
    inv = inv * (2.0 - denom * inv)
    inv = inv * (2.0 - denom * inv)

    gamma = g_ref[...].astype(jnp.float32)        # (1, F), VMEM-resident across steps
    beta = b_ref[...].astype(jnp.float32)         # (1, F), VMEM-resident across steps
    o_ref[...] = (gamma * (d * inv) + beta).astype(o_ref.dtype)


def layer_norm(x, gamma, beta, eps=1e-6, block_bytes=2 * 1024 * 1024):
    """LayerNorm over the last axis, matching the PyTorch `LayerNorm` module.

    x: (..., F). gamma, beta: (F,).
    """
    orig_shape = x.shape
    feat = orig_shape[-1]
    x2d = x.reshape(-1, feat)                     # metadata-only reshape
    rows = x2d.shape[0]

    # Row-tile sizing: target ~block_bytes per f32 input block; keep it a multiple
    # of 8 (sublane) and never larger than the (8-rounded) row count.
    tile_rows = max(8, (block_bytes // (feat * 4)) // 8 * 8)
    tile_rows = min(tile_rows, pl.cdiv(rows, 8) * 8)

    rows_padded = pl.cdiv(rows, tile_rows) * tile_rows
    if rows_padded != rows:
        # Zero padding is safe: padded rows produce `beta` (denom = eps > 0, no
        # NaN/Inf) and are sliced off below.
        x2d = jnp.pad(x2d, ((0, rows_padded - rows), (0, 0)))

    g2d = gamma.reshape(1, feat)
    b2d = beta.reshape(1, feat)

    kernel = functools.partial(_layernorm_kernel, eps=eps)

    out = pl.pallas_call(
        kernel,
        out_shape=jax.ShapeDtypeStruct((rows_padded, feat), x.dtype),
        grid_spec=pltpu.PrefetchScalarGridSpec(
            num_scalar_prefetch=0,
            grid=(rows_padded // tile_rows,),
            in_specs=[
                pl.BlockSpec((tile_rows, feat), lambda i: (i, 0)),
                pl.BlockSpec((1, feat), lambda i: (0, 0)),
                pl.BlockSpec((1, feat), lambda i: (0, 0)),
            ],
            out_specs=pl.BlockSpec((tile_rows, feat), lambda i: (i, 0)),
        ),
        compiler_params=pltpu.CompilerParams(
            dimension_semantics=("parallel",),
            vmem_limit_bytes=32 * 1024 * 1024,
        ),
    )(x2d, g2d, b2d)

    if rows_padded != rows:
        out = out[:rows]
    return out.reshape(orig_shape)


def _reference(x, gamma, beta, eps=1e-6):
    x32 = x.astype(jnp.float32)
    mean = jnp.mean(x32, axis=-1, keepdims=True)
    d = x32 - mean
    var = jnp.sum(d * d, axis=-1, keepdims=True) / (x.shape[-1] - 1)
    std = jnp.sqrt(var)
    return (gamma * d / (std + eps) + beta).astype(x.dtype)


if __name__ == "__main__":
    key = jax.random.PRNGKey(0)
    # Kernel implements the Decoder's final LayerNorm; the decoder layers themselves
    # are opaque user-supplied modules in the spec and run as fused XLA ops upstream.
    batch, seq, d_model = 2, 8, 512   # transformer-style width (>=128 -> lane-dense)
    x = jax.random.normal(key, (batch, seq, d_model), dtype=jnp.float32)

    # Deterministic parameter init, same as nn.Parameter(torch.ones/zeros).
    gamma = jnp.ones((d_model,), dtype=jnp.float32)
    beta = jnp.zeros((d_model,), dtype=jnp.float32)

    out = layer_norm(x, gamma, beta, eps=1e-6)
    out = jax.block_until_ready(out)

    ref = _reference(x, gamma, beta, eps=1e-6)
    assert out.shape == x.shape
    assert jnp.allclose(out, ref, atol=1e-5, rtol=1e-5), float(jnp.max(jnp.abs(out - ref)))
    print("KERNEL_OK")
</pallas_src>

<mosaic_0001>
module attributes {stable_mosaic.version = 11 : i64} {
  func.func @_layernorm_kernel(%arg0: i32, %arg1: memref<16x512xf32, #tpu.memory_space<vmem>>, %arg2: memref<1x512xf32, #tpu.memory_space<vmem>>, %arg3: memref<1x512xf32, #tpu.memory_space<vmem>>, %arg4: memref<16x512xf32, #tpu.memory_space<vmem>>) attributes {dimension_semantics = [#tpu.dimension_semantics<parallel>], iteration_bounds = array<i64: 1>, scalar_prefetch = 0 : i64, scratch_operands = 0 : i64, tpu.core_type = #tpu.core_type<tc>, window_params = [{transform_indices = @transform_0, window_bounds = array<i64: 16, 512>}, {pipeline_mode = #tpu.pipeline_mode<synchronous>, transform_indices = @transform_1, window_bounds = array<i64: 1, 512>}, {pipeline_mode = #tpu.pipeline_mode<synchronous>, transform_indices = @transform_2, window_bounds = array<i64: 1, 512>}, {transform_indices = @transform_3, window_bounds = array<i64: 16, 512>}]} {
    %c0 = arith.constant 0 : index
    %c0_0 = arith.constant 0 : index
    %0 = vector.load %arg1[%c0, %c0_0] : memref<16x512xf32, #tpu.memory_space<vmem>>, vector<16x512xf32>
    %cst = arith.constant dense<0.000000e+00> : vector<16xf32>
    %1 = vector.multi_reduction <add>, %0, %cst [1] : vector<16x512xf32> to vector<16xf32>
    %2 = vector.shape_cast %1 : vector<16xf32> to vector<16x1xf32>
    %cst_1 = arith.constant 5.120000e+02 : f32
    %3 = vector.broadcast %cst_1 : f32 to vector<16x1xf32>
    %4 = arith.divf %2, %3 : vector<16x1xf32>
    %5 = vector.broadcast %4 : vector<16x1xf32> to vector<16x512xf32>
    %6 = arith.subf %0, %5 : vector<16x512xf32>
    %7 = arith.mulf %6, %6 : vector<16x512xf32>
    %cst_2 = arith.constant dense<0.000000e+00> : vector<16xf32>
    %8 = vector.multi_reduction <add>, %7, %cst_2 [1] : vector<16x512xf32> to vector<16xf32>
    %9 = vector.shape_cast %8 : vector<16xf32> to vector<16x1xf32>
    %cst_3 = arith.constant 0.00195694715 : f32
    %10 = vector.broadcast %cst_3 : f32 to vector<16x1xf32>
    %11 = arith.mulf %9, %10 : vector<16x1xf32>
    %12 = math.sqrt %11 : vector<16x1xf32>
    %cst_4 = arith.constant 9.99999997E-7 : f32
    %13 = vector.broadcast %cst_4 : f32 to vector<16x1xf32>
    %14 = arith.addf %12, %13 : vector<16x1xf32>
    %15 = tpu.reciprocal %14 {approx = true} : vector<16x1xf32> -> vector<16x1xf32>
    %16 = arith.mulf %14, %15 : vector<16x1xf32>
    %cst_5 = arith.constant 2.000000e+00 : f32
    %17 = vector.broadcast %cst_5 : f32 to vector<16x1xf32>
    %18 = arith.subf %17, %16 : vector<16x1xf32>
    %19 = arith.mulf %15, %18 : vector<16x1xf32>
    %20 = arith.mulf %14, %19 : vector<16x1xf32>
    %cst_6 = arith.constant 2.000000e+00 : f32
    %21 = vector.broadcast %cst_6 : f32 to vector<16x1xf32>
    %22 = arith.subf %21, %20 : vector<16x1xf32>
    %23 = arith.mulf %19, %22 : vector<16x1xf32>
    %c0_7 = arith.constant 0 : index
    %c0_8 = arith.constant 0 : index
    %24 = vector.load %arg2[%c0_7, %c0_8] : memref<1x512xf32, #tpu.memory_space<vmem>>, vector<1x512xf32>
    %c0_9 = arith.constant 0 : index
    %c0_10 = arith.constant 0 : index
    %25 = vector.load %arg3[%c0_9, %c0_10] : memref<1x512xf32, #tpu.memory_space<vmem>>, vector<1x512xf32>
    %26 = vector.broadcast %23 : vector<16x1xf32> to vector<16x512xf32>
    %27 = arith.mulf %6, %26 : vector<16x512xf32>
    %28 = vector.broadcast %24 : vector<1x512xf32> to vector<16x512xf32>
    %29 = arith.mulf %28, %27 : vector<16x512xf32>
    %30 = vector.broadcast %25 : vector<1x512xf32> to vector<16x512xf32>
    %31 = arith.addf %29, %30 : vector<16x512xf32>
    %c0_11 = arith.constant 0 : index
    %c0_12 = arith.constant 0 : index
    %32 = vector.load %arg4[%c0_11, %c0_12] : memref<16x512xf32, #tpu.memory_space<vmem>>, vector<16x512xf32>
    tpu.vector_store %arg4[%c0_11, %c0_12], %31 {strides = array<i32>} : memref<16x512xf32, #tpu.memory_space<vmem>>, vector<16x512xf32>,
    return
  }
  func.func @transform_0(%arg0: i32) -> (i32, i32) {
    %c0_i32 = arith.constant 0 : i32
    %c0_i32_0 = arith.constant 0 : i32
    return %arg0, %c0_i32 : i32, i32
  }
  func.func @transform_1(%arg0: i32) -> (i32, i32) {
    %c0_i32 = arith.constant 0 : i32
    %c0_i32_0 = arith.constant 0 : i32
    %c0_i32_1 = arith.constant 0 : i32
    return %c0_i32, %c0_i32_0 : i32, i32
  }
  func.func @transform_2(%arg0: i32) -> (i32, i32) {
    %c0_i32 = arith.constant 0 : i32
    %c0_i32_0 = arith.constant 0 : i32
    %c0_i32_1 = arith.constant 0 : i32
    return %c0_i32, %c0_i32_0 : i32, i32
  }
  func.func @transform_3(%arg0: i32) -> (i32, i32) {
    %c0_i32 = arith.constant 0 : i32
    %c0_i32_0 = arith.constant 0 : i32
    return %arg0, %c0_i32 : i32, i32
  }
}

</mosaic_0001>

<llo_original>
// kernel: tpu_custom_call.1
$region0: #{tpu_custom_call.1}
  #allocation0 [shape = 'u32[]', space=smem, size = 0x4, offset = 0x4, fixed_abs, tag = 'smem constant byte address 0x4 - core index']
  #allocation1 [shape = 'u32[144,128]{1,0:T(1,128)}', space=vmem, size = 0x12000, scoped, tag = 'internal scratch']
  %s0 = inlined_call_operand.hbm [shape: f32[16,512], index: 0, kind: input, shape index: {}]
  %s1 = inlined_call_operand.hbm [shape: f32[1,512], index: 1, kind: input, shape index: {}]
  %s2 = inlined_call_operand.vmem [shape: f32[1,512], index: 2, kind: input, shape index: {}]
  %s3 = inlined_call_operand.hbm [shape: f32[16,512], index: 3, kind: output, shape index: {}]
  %s4 = sld [smem:[#allocation0]]
  $region30: #{tpu_custom_call.1} parent=0
    _
  %s6 = ssub.s32 1, %s4
  %s7 = scalar_select 0, %s6, %s4
  $region1: #{tpu_custom_call.1} parent=0
    #allocation2 [shape = 'u8[32768]{0}', space=vmem, size = 0x8000, scoped, tag = 'input window, operand 0, single buffered']
    #allocation3 [shape = 's32[1]{0}', space=sflag, size = 0x4, scoped, tag = 'scoped memory for tpu_custom_call.1']
    #allocation4 [shape = 's32[1]{0}', space=sflag, size = 0x4, scoped, tag = 'scoped memory for tpu_custom_call.1']
    #allocation5 [shape = 'u8[2048]{0}', space=vmem, size = 0x800, scoped, tag = 'input window, operand 1, single buffered']
    #allocation6 [shape = 's32[1]{0}', space=sflag, size = 0x4, scoped, tag = 'scoped memory for tpu_custom_call.1']
    #allocation7 [shape = 'u8[32768]{0}', space=vmem, size = 0x8000, scoped, tag = 'output window, operand 0, single buffered']
    %8 = vsyncpa [#allocation3], 0
    %9 = vsyncpa [#allocation6], 0
    %10 = vsyncpa [#allocation4], 0
    // Predicated region
    $region2: #{tpu_custom_call.1} parent=1 // pred_check
      _
    $region3: #{tpu_custom_call.1} parent=1 // pred_check_branch
      %12 = sbr.rel (0) target = $region5
    $region4: #{tpu_custom_call.1} parent=1 // pred_region
      %s14 = ssub.s32 1024, 1024
      %15 = vsyncadd [#allocation3], %s14
      %s16 = sshll.u32 [#allocation2], 4
      %s17 = int_to_ptr.vmem [resolvable:$true] %s16
      %22 = dma.hbm_to_vmem [thread:$0]  %s0, 1024, %s17, [#allocation3], 512, 512, 32
    $region5: #{tpu_custom_call.1} parent=1 // pred_fallthru
      _
    // Predicated region
    $region6: #{tpu_custom_call.1} parent=1 // pred_check
      _
    $region7: #{tpu_custom_call.1} parent=1 // pred_check_branch
      %24 = sbr.rel (0) target = $region9
    $region8: #{tpu_custom_call.1} parent=1 // pred_region
      %s26 = ssub.s32 64, 64
      %27 = vsyncadd [#allocation6], %s26
      %s29 = sshll.u32 [#allocation5], 4
      %s30 = int_to_ptr.vmem [resolvable:$true] %s29
      %32 = dma.hbm_to_vmem [thread:$0]  %s1, 64, %s30, [#allocation6]
    $region9: #{tpu_custom_call.1} parent=1 // pred_fallthru
      _
    // Predicated region
    $region10: #{tpu_custom_call.1} parent=1 // pred_check
      _
    $region11: #{tpu_custom_call.1} parent=1 // pred_check_branch
      %34 = sbr.rel (0) target = $region13
    $region12: #{tpu_custom_call.1} parent=1 // pred_region
      _
    $region13: #{tpu_custom_call.1} parent=1 // pred_fallthru
      _
    // Predicated region
    $region14: #{tpu_custom_call.1} parent=1 // pred_check
      _
    $region15: #{tpu_custom_call.1} parent=1 // pred_check_branch
      %36 = sbr.rel (0) target = $region17
    $region16: #{tpu_custom_call.1} parent=1 // pred_region
      %37 = dma.done [#allocation3], 1024
    $region17: #{tpu_custom_call.1} parent=1 // pred_fallthru
      _
    // Predicated region
    $region18: #{tpu_custom_call.1} parent=1 // pred_check
      _
    $region19: #{tpu_custom_call.1} parent=1 // pred_check_branch
      %39 = sbr.rel (0) target = $region21
    $region20: #{tpu_custom_call.1} parent=1 // pred_region
      %40 = dma.done [#allocation6], 64
    $region21: #{tpu_custom_call.1} parent=1 // pred_fallthru
      _
    %v41 = vld [vmem:[#allocation2] sm:$0xff]
    %v42 = vld [vmem:[#allocation2 + $0x8] sm:$0xff]
    %v43 = vld [vmem:[#allocation2 + $0x10] sm:$0xff]
    %v44 = vld [vmem:[#allocation2 + $0x18] sm:$0xff]
    %v45 = vld [vmem:[#allocation2 + $0x20] sm:$0xff]
    %v46 = vld [vmem:[#allocation2 + $0x28] sm:$0xff]
    %v47 = vld [vmem:[#allocation2 + $0x30] sm:$0xff]
    %v48 = vld [vmem:[#allocation2 + $0x38] sm:$0xff]
    %v49 = vadd.f32 %v41, %v42
    %v50 = vadd.f32 %v49, %v43
    %v51 = vadd.f32 %v50, %v44
    %52 = vadd.xlane.f32.xlu0 %v51
    %v53 = vpop.xlane.xlu0 %52
    %v54 = vadd.f32 %v45, %v46
    %v55 = vadd.f32 %v54, %v47
    %v56 = vadd.f32 %v55, %v48
    %57 = vadd.xlane.f32.xlu0 %v56
    %v58 = vpop.xlane.xlu0 %57
    %v59 = vrcp.pop 512.0
    %v60 = vmul.f32 %v53, %v59
    %v61 = vmul.f32 %v58, %v59
    %v62 = vsub.f32 %v41, %v60
    %v63 = vsub.f32 %v42, %v60
    %v64 = vsub.f32 %v43, %v60
    %v65 = vsub.f32 %v44, %v60
    %v66 = vsub.f32 %v45, %v61
    %v67 = vsub.f32 %v46, %v61
    %v68 = vsub.f32 %v47, %v61
    %v69 = vsub.f32 %v48, %v61
    %v70 = vmul.f32 %v62, %v62
    %v71 = vmul.f32 %v63, %v63
    %v72 = vmul.f32 %v64, %v64
    %v73 = vmul.f32 %v65, %v65
    %v74 = vmul.f32 %v66, %v66
    %v75 = vmul.f32 %v67, %v67
    %v76 = vmul.f32 %v68, %v68
    %v77 = vmul.f32 %v69, %v69
    %v78 = vadd.f32 %v70, %v71
    %v79 = vadd.f32 %v78, %v72
    %v80 = vadd.f32 %v79, %v73
    %81 = vadd.xlane.f32.xlu0 %v80
    %v82 = vpop.xlane.xlu0 %81
    %v83 = vadd.f32 %v74, %v75
    %v84 = vadd.f32 %v83, %v76
    %v85 = vadd.f32 %v84, %v77
    %86 = vadd.xlane.f32.xlu0 %v85
    %v87 = vpop.xlane.xlu0 %86
    %v88 = vmul.f32 %v82, 0.0019569471
    %v89 = vmul.f32 %v87, 0.0019569471
    %v90 = vrsqrt.pop %v88
    %v91 = vmul.f32 %v88, %v90
    %vm92 = vcmp.eq.f32.partialorder %v88, inf
    %v93 = vsel %vm92, %v88, %v91
    %vm94 = vcmp.eq.f32.partialorder %v88, 0.0
    %v95 = vand.u32 %v88, 2147483648
    %v96 = vsel %vm94, %v95, %v93
    %v97 = vrsqrt.pop %v89
    %v98 = vmul.f32 %v89, %v97
    %vm99 = vcmp.eq.f32.partialorder %v89, inf
    %v100 = vsel %vm99, %v89, %v98
    %vm101 = vcmp.eq.f32.partialorder %v89, 0.0
    %v102 = vand.u32 %v89, 2147483648
    %v103 = vsel %vm101, %v102, %v100
    %v104 = vadd.f32 %v96, 1e-06
    %v105 = vadd.f32 %v103, 1e-06
    %v106 = vrcp.pop %v104
    %v107 = vrcp.pop %v105
    %v108 = vmul.f32 %v104, %v106
    %v109 = vmul.f32 %v105, %v107
    %v110 = vsub.f32 2.0, %v108
    %v111 = vsub.f32 2.0, %v109
    %v112 = vmul.f32 %v106, %v110
    %v113 = vmul.f32 %v107, %v111
    %v114 = vmul.f32 %v104, %v112
    %v115 = vmul.f32 %v105, %v113
    %v116 = vsub.f32 2.0, %v114
    %v117 = vsub.f32 2.0, %v115
    %v118 = vmul.f32 %v112, %v116
    %v119 = vmul.f32 %v113, %v117
    %v120 = vld [vmem:[#allocation5] sm:$0xf]
    %v121 = vld [vmem:[%s2] sm:$0xf]
    %v122 = vmul.f32 %v62, %v118
    %v123 = vmul.f32 %v63, %v118
    %v124 = vmul.f32 %v64, %v118
    %v125 = vmul.f32 %v65, %v118
    %v126 = vmul.f32 %v66, %v119
    %v127 = vmul.f32 %v67, %v119
    %v128 = vmul.f32 %v68, %v119
    %v129 = vmul.f32 %v69, %v119
    %v131 = vlaneseq
    %v132 = vshrl.u32 %v131, 7
    %v133 = vsub.s32 0, %v132
    %v134 = vrot.slane %v120, %v133
    %v135 = vlaneseq
    %v136 = vshrl.u32 %v135, 7
    %v137 = vsub.s32 1, %v136
    %v138 = vrot.slane %v120, %v137
    %v139 = vlaneseq
    %v140 = vshrl.u32 %v139, 7
    %v141 = vsub.s32 2, %v140
    %v142 = vrot.slane %v120, %v141
    %v143 = vlaneseq
    %v144 = vshrl.u32 %v143, 7
    %v145 = vsub.s32 3, %v144
    %v146 = vrot.slane %v120, %v145
    %v151 = vmul.f32 %v134, %v122
    %v152 = vmul.f32 %v138, %v123
    %v153 = vmul.f32 %v142, %v124
    %v154 = vmul.f32 %v146, %v125
    %v155 = vmul.f32 %v134, %v126
    %v156 = vmul.f32 %v138, %v127
    %v157 = vmul.f32 %v142, %v128
    %v158 = vmul.f32 %v146, %v129
    %v160 = vlaneseq
    %v161 = vshrl.u32 %v160, 7
    %v162 = vsub.s32 0, %v161
    %v163 = vrot.slane %v121, %v162
    %v164 = vlaneseq
    %v165 = vshrl.u32 %v164, 7
    %v166 = vsub.s32 1, %v165
    %v167 = vrot.slane %v121, %v166
    %v168 = vlaneseq
    %v169 = vshrl.u32 %v168, 7
    %v170 = vsub.s32 2, %v169
    %v171 = vrot.slane %v121, %v170
    %v172 = vlaneseq
    %v173 = vshrl.u32 %v172, 7
    %v174 = vsub.s32 3, %v173
    %v175 = vrot.slane %v121, %v174
    %v180 = vadd.f32 %v151, %v163
    %v181 = vadd.f32 %v152, %v167
    %v182 = vadd.f32 %v153, %v171
    %v183 = vadd.f32 %v154, %v175
    %v184 = vadd.f32 %v155, %v163
    %v185 = vadd.f32 %v156, %v167
    %v186 = vadd.f32 %v157, %v171
    %v187 = vadd.f32 %v158, %v175
    %188 = vst [vmem:[#allocation7] sm:$0xff] %v180
    %189 = vst [vmem:[#allocation7 + $0x8] sm:$0xff] %v181
    %190 = vst [vmem:[#allocation7 + $0x10] sm:$0xff] %v182
    %191 = vst [vmem:[#allocation7 + $0x18] sm:$0xff] %v183
    %192 = vst [vmem:[#allocation7 + $0x20] sm:$0xff] %v184
    %193 = vst [vmem:[#allocation7 + $0x28] sm:$0xff] %v185
    %194 = vst [vmem:[#allocation7 + $0x30] sm:$0xff] %v186
    %195 = vst [vmem:[#allocation7 + $0x38] sm:$0xff] %v187
    // Predicated region
    $region22: #{tpu_custom_call.1} parent=1 // pred_check
      _
    $region23: #{tpu_custom_call.1} parent=1 // pred_check_branch
      %197 = sbr.rel (0) target = $region25
    $region24: #{tpu_custom_call.1} parent=1 // pred_region
      %s199 = ssub.s32 1024, 1024
      %200 = vsyncadd [#allocation4], %s199
      %s201 = sshll.u32 [#allocation7], 4
      %s202 = int_to_ptr.vmem [resolvable:$true] %s201
      %207 = dma.vmem_to_hbm [thread:$0]  %s202, 1024, %s3, [#allocation4], 512, 512, 32
    $region25: #{tpu_custom_call.1} parent=1 // pred_fallthru
      _
    // Predicated region
    $region26: #{tpu_custom_call.1} parent=1 // pred_check
      _
    $region27: #{tpu_custom_call.1} parent=1 // pred_check_branch
      %209 = sbr.rel (0) target = $region29
    $region28: #{tpu_custom_call.1} parent=1 // pred_region
      %210 = dma.done [#allocation4], 1024
    $region29: #{tpu_custom_call.1} parent=1 // pred_fallthru
      _
    %211 = vsyncpa [#allocation3], 1
    %212 = vsyncpa [#allocation6], 1
    %213 = vsyncpa [#allocation4], 1

</llo_original>
